<compile_context>
chip_gen: v5e
topology: v5e:2x2
jax: 0.10.0
libtpu: 0.0.40
codegen_flags: <defaults>
</compile_context>

<pallas_src>
import functools

import jax
import jax.numpy as jnp
import numpy as np
from jax.experimental import pallas as pl
from jax.experimental.pallas import tpu as pltpu

EPS = 1e-12


def _round_up(a: int, b: int) -> int:
    return ((a + b - 1) // b) * b


def _nsvq_kernel(x_ref, cb_ref, cbsq_ref, rnd_ref,
                 q_ref, idx_ref, cnt_ref, err_ref, *, n_valid: int):
    """One grid step processes a (tn, D) tile of flattened input rows.

    x_ref    : (tn, D)   f32   flattened input rows (zero-padded past n_valid)
    cb_ref   : (K,  D)   bf16  codebook (resident; only feeds the MXU matmul)
    cbsq_ref : (1,  K)   f32   precomputed ||c_k||^2
    rnd_ref  : (tn, D)   f32   standard-normal noise (padded rows are 1.0)
    q_ref    : (tn, D)   f32   quantized_input tile
    idx_ref  : (tn, 1)   i32   argmin codebook index per row
    cnt_ref  : (1, 1, K) f32   per-tile codebook usage counts (padded rows masked)
    err_ref  : (tn, 1)   f32   per-row sum(vq_error^2) (padded rows masked to 0)
    """
    tn = x_ref.shape[0]
    k = cb_ref.shape[0]

    x = x_ref[...]                              # (tn, D) f32
    rnd = rnd_ref[...]                          # (tn, D) f32
    cb_sq = cbsq_ref[...]                       # (1, K)  f32

    # Distance up to the per-row constant ||x||^2 (argmin ignores it):
    #   dist'[n,k] = ||c_k||^2 - 2 * x_n . c_k        -> (tn, K)
    # bf16 MXU matmul, f32 accumulation.
    xct = jax.lax.dot_general(
        x.astype(jnp.bfloat16), cb_ref[...],
        (((1,), (1,)), ((), ())),
        preferred_element_type=jnp.float32)      # (tn, K)
    dist = cb_sq - 2.0 * xct

    # argmin over K (first occurrence on ties)
    min_val = jnp.min(dist, axis=1, keepdims=True)                    # (tn, 1)
    lane_iota = jax.lax.broadcasted_iota(jnp.int32, dist.shape, 1)    # (tn, K)
    idx = jnp.min(jnp.where(dist == min_val, lane_iota, k),
                  axis=1, keepdims=True)                              # (tn, 1) i32

    # Residual norm^2 equals the min squared distance; add ||x||^2 back to the
    # (tn,1) minimum only, and clamp (f32 cancellation can dip below 0).
    x_sq = jnp.sum(x * x, axis=1, keepdims=True)                      # (tn, 1)
    res_sq = jnp.maximum(x_sq + min_val, 0.0)
    rnd_sq = jnp.sum(rnd * rnd, axis=1, keepdims=True)                # (tn, 1)

    # NSVQ noise substitution. eps added to the quotient to match the reference
    # module exactly: (||residual|| / ||noise|| + eps) * noise.
    scale = jnp.sqrt(res_sq) * jax.lax.rsqrt(rnd_sq) + EPS            # (tn, 1)
    q_ref[...] = x + scale * rnd
    idx_ref[...] = idx

    # Mask rows past the true N (zero/one padding of the last tile).
    row_id = (pl.program_id(0) * tn
              + jax.lax.broadcasted_iota(jnp.int32, (tn, 1), 0))
    valid = row_id < n_valid                                          # (tn, 1)

    # Codebook usage counts: compare + column sum (no gather matmul).
    onehot = jnp.where((lane_iota == idx) & valid, 1.0, 0.0)          # (tn, K)
    cnt_ref[...] = jnp.sum(onehot, axis=0, keepdims=True).reshape(1, 1, k)

    # sum_d vq_error^2 == scale^2 * ||noise||^2
    err_ref[...] = jnp.where(valid, scale * scale * rnd_sq, 0.0)


@functools.partial(jax.jit, static_argnames=("beta", "tile_n"))
def nsvq_forward(input_data, codebooks, random_vector, beta=0.25, tile_n=512):
    """Returns (quantized_input, codebook_loss, min_indices, perplexity).

    input_data    : (bz, seq, e_dim) f32
    codebooks     : (n_e, e_dim)     f32
    random_vector : (bz, seq, e_dim) f32   standard normal noise
    """
    bz = input_data.shape[0]
    n_e, e_dim = codebooks.shape

    x = input_data.reshape(-1, e_dim).astype(jnp.float32)
    rnd = random_vector.reshape(-1, e_dim).astype(jnp.float32)
    n = x.shape[0]

    # Tile size: multiple of 8 (sublane), <= tile_n (sweep 256-1024; keep the
    # (tn,K) + 2x(tn,D) working set well under v7x's 64 MiB VMEM for large K).
    tn = min(_round_up(tile_n, 8), _round_up(n, 8))
    num_tiles = pl.cdiv(n, tn)
    n_pad = num_tiles * tn
    if n_pad != n:
        x = jnp.pad(x, ((0, n_pad - n), (0, 0)))
        rnd = jnp.pad(rnd, ((0, n_pad - n), (0, 0)), constant_values=1.0)

    cb_f32 = codebooks.astype(jnp.float32)
    cb_bf16 = cb_f32.astype(jnp.bfloat16)                  # matmul operand only
    cb_sq = jnp.sum(cb_f32 * cb_f32, axis=1)[None, :]      # (1, n_e) f32, once

    kernel = functools.partial(_nsvq_kernel, n_valid=n)

    q, idx, cnt, err = pl.pallas_call(
        kernel,
        out_shape=(
            jax.ShapeDtypeStruct((n_pad, e_dim), jnp.float32),
            jax.ShapeDtypeStruct((n_pad, 1), jnp.int32),
            jax.ShapeDtypeStruct((num_tiles, 1, n_e), jnp.float32),
            jax.ShapeDtypeStruct((n_pad, 1), jnp.float32),
        ),
        grid_spec=pltpu.PrefetchScalarGridSpec(
            num_scalar_prefetch=0,
            grid=(num_tiles,),
            in_specs=[
                pl.BlockSpec((tn, e_dim), lambda i: (i, 0)),     # x tile
                pl.BlockSpec((n_e, e_dim), lambda i: (0, 0)),    # codebook (resident)
                pl.BlockSpec((1, n_e), lambda i: (0, 0)),        # ||c||^2 (resident)
                pl.BlockSpec((tn, e_dim), lambda i: (i, 0)),     # noise tile
            ],
            out_specs=[
                pl.BlockSpec((tn, e_dim), lambda i: (i, 0)),     # quantized
                pl.BlockSpec((tn, 1), lambda i: (i, 0)),         # indices
                pl.BlockSpec((1, 1, n_e), lambda i: (i, 0, 0)),  # per-tile counts
                pl.BlockSpec((tn, 1), lambda i: (i, 0)),         # per-row err^2
            ],
        ),
        compiler_params=pltpu.CompilerParams(
            dimension_semantics=("parallel",),
            vmem_limit_bytes=32 * 1024 * 1024),
    )(x, cb_bf16, cb_sq, rnd)

    # Scalar glue from per-tile / per-row partials.
    counts = jnp.sum(cnt, axis=(0, 1))                           # (n_e,)
    avg_probs = counts / n
    perplexity = jnp.exp(-jnp.sum(avg_probs * jnp.log(avg_probs + EPS)))

    # Forward value of beta*mean((q.detach-x)^2) + mean((q-x.detach)^2).
    codebook_loss = (1.0 + beta) * jnp.sum(err) / (n * e_dim)

    quantized_input = q[:n].reshape(bz, -1, e_dim)
    min_indices = idx[:n, 0]

    # TODO(synk): the stateful `codebooks_used[min_indices] += 1` counter and the
    # detach-based straight-through gradient semantics are training-time side
    # effects; the caller can update an external int32 counter from min_indices,
    # and a custom VJP would be needed to reproduce the detach behavior.
    return quantized_input, codebook_loss, min_indices, perplexity


def _nsvq_ref(input_data, codebooks, random_vector, beta=0.25):
    """Pure-JAX reference (f32 everywhere) mirroring the PyTorch forward."""
    n_e, e_dim = codebooks.shape
    bz = input_data.shape[0]
    x = input_data.reshape(-1, e_dim).astype(jnp.float32)
    rnd = random_vector.reshape(-1, e_dim).astype(jnp.float32)
    cb = codebooks.astype(jnp.float32)
    d = (jnp.sum(x * x, 1, keepdims=True) - 2.0 * x @ cb.T
         + jnp.sum(cb * cb, 1)[None, :])
    idx = jnp.argmin(d, axis=1)
    hard = cb[idx]
    res = jnp.sqrt(jnp.sum((x - hard) ** 2, 1, keepdims=True))
    rn = jnp.sqrt(jnp.sum(rnd * rnd, 1, keepdims=True))
    vq_err = (res / rn + EPS) * rnd
    q = x + vq_err
    counts = jnp.sum(jax.nn.one_hot(idx, n_e, dtype=jnp.float32), axis=0)
    avg = counts / x.shape[0]
    ppl = jnp.exp(-jnp.sum(avg * jnp.log(avg + EPS)))
    loss = (1.0 + beta) * jnp.mean(vq_err ** 2)
    return q.reshape(bz, -1, e_dim), loss, idx, ppl


def _check(out, ref, n_e):
    q, loss, idx, ppl = out
    q_r, loss_r, _, ppl_r = ref
    np.testing.assert_allclose(np.asarray(q), np.asarray(q_r), rtol=0.1, atol=0.2)
    np.testing.assert_allclose(float(loss), float(loss_r), rtol=0.1, atol=1e-3)
    np.testing.assert_allclose(float(ppl), float(ppl_r), rtol=0.2, atol=2.0)
    assert int(jnp.min(idx)) >= 0 and int(jnp.max(idx)) < n_e
    assert bool(jnp.all(jnp.isfinite(q)))


if __name__ == "__main__":
    # module hyper-params (small, consistent with NSVQ(n_e, e_dim, beta))
    n_e, e_dim, beta = 128, 32, 0.25
    bz, seq = 2, 8

    key = jax.random.PRNGKey(0)
    k_cb, k_x, k_rnd, k_x2, k_rnd2 = jax.random.split(key, 5)

    # 'normal' initialization of the codebooks (deterministic, in-script)
    codebooks = jax.random.normal(k_cb, (n_e, e_dim), dtype=jnp.float32)
    input_data = jax.random.normal(k_x, (bz, seq, e_dim), dtype=jnp.float32)
    random_vector = jax.random.normal(k_rnd, (bz, seq, e_dim), dtype=jnp.float32)

    # 1) main run (single tile at this size)
    out1 = nsvq_forward(input_data, codebooks, random_vector, beta=beta)
    jax.block_until_ready(out1)
    ref1 = _nsvq_ref(input_data, codebooks, random_vector, beta)
    q1, loss1, idx1, ppl1 = out1
    assert q1.shape == (bz, seq, e_dim)
    assert idx1.shape == (bz * seq,)
    assert loss1.shape == () and ppl1.shape == ()
    _check(out1, ref1, n_e)

    # 2) force a multi-tile grid on the same data; must match run 1 closely
    out2 = nsvq_forward(input_data, codebooks, random_vector, beta=beta, tile_n=8)
    jax.block_until_ready(out2)
    np.testing.assert_allclose(np.asarray(out2[0]), np.asarray(q1),
                               rtol=1e-5, atol=1e-5)
    np.testing.assert_allclose(float(out2[1]), float(loss1), rtol=1e-5, atol=1e-6)

    # 3) ragged N (exercises pad + in-kernel validity mask)
    x3 = jax.random.normal(k_x2, (bz, 5, e_dim), dtype=jnp.float32)
    r3 = jax.random.normal(k_rnd2, (bz, 5, e_dim), dtype=jnp.float32)
    out3 = nsvq_forward(x3, codebooks, r3, beta=beta)
    jax.block_until_ready(out3)
    ref3 = _nsvq_ref(x3, codebooks, r3, beta)
    assert out3[0].shape == (bz, 5, e_dim) and out3[2].shape == (bz * 5,)
    _check(out3, ref3, n_e)

    print("KERNEL_OK")
</pallas_src>

<mosaic_0001>
module attributes {stable_mosaic.version = 11 : i64} {
  func.func @_nsvq_kernel(%arg0: i32, %arg1: memref<16x32xf32, #tpu.memory_space<vmem>>, %arg2: memref<128x32xbf16, #tpu.memory_space<vmem>>, %arg3: memref<1x128xf32, #tpu.memory_space<vmem>>, %arg4: memref<16x32xf32, #tpu.memory_space<vmem>>, %arg5: memref<16x32xf32, #tpu.memory_space<vmem>>, %arg6: memref<16x1xi32, #tpu.memory_space<vmem>>, %arg7: memref<1x1x128xf32, #tpu.memory_space<vmem>>, %arg8: memref<16x1xf32, #tpu.memory_space<vmem>>) attributes {dimension_semantics = [#tpu.dimension_semantics<parallel>], iteration_bounds = array<i64: 1>, scalar_prefetch = 0 : i64, scratch_operands = 0 : i64, tpu.core_type = #tpu.core_type<tc>, window_params = [{transform_indices = @transform_0, window_bounds = array<i64: 16, 32>}, {pipeline_mode = #tpu.pipeline_mode<synchronous>, transform_indices = @transform_1, window_bounds = array<i64: 128, 32>}, {pipeline_mode = #tpu.pipeline_mode<synchronous>, transform_indices = @transform_2, window_bounds = array<i64: 1, 128>}, {transform_indices = @transform_3, window_bounds = array<i64: 16, 32>}, {transform_indices = @transform_4, window_bounds = array<i64: 16, 32>}, {transform_indices = @transform_5, window_bounds = array<i64: 16, 1>}, {transform_indices = @transform_6, window_bounds = array<i64: 1, 1, 128>}, {transform_indices = @transform_7, window_bounds = array<i64: 16, 1>}]} {
    %c0 = arith.constant 0 : index
    %c0_0 = arith.constant 0 : index
    %0 = vector.load %arg1[%c0, %c0_0] : memref<16x32xf32, #tpu.memory_space<vmem>>, vector<16x32xf32>
    %c0_1 = arith.constant 0 : index
    %c0_2 = arith.constant 0 : index
    %1 = vector.load %arg4[%c0_1, %c0_2] : memref<16x32xf32, #tpu.memory_space<vmem>>, vector<16x32xf32>
    %c0_3 = arith.constant 0 : index
    %c0_4 = arith.constant 0 : index
    %2 = vector.load %arg3[%c0_3, %c0_4] : memref<1x128xf32, #tpu.memory_space<vmem>>, vector<1x128xf32>
    %3 = arith.truncf %0 : vector<16x32xf32> to vector<16x32xbf16>
    %c0_5 = arith.constant 0 : index
    %c0_6 = arith.constant 0 : index
    %4 = vector.load %arg2[%c0_5, %c0_6] : memref<128x32xbf16, #tpu.memory_space<vmem>>, vector<128x32xbf16>
    %cst = arith.constant dense<0.000000e+00> : vector<16x128xf32>
    %5 = tpu.matmul %3, %4, %cst {dimension_numbers = #tpu.dot_dimension_numbers<[1], [1], [0], [0], [0, 0, 1, 0], [], []>} : vector<16x32xbf16>, vector<128x32xbf16>, vector<16x128xf32> -> vector<16x128xf32>
    %cst_7 = arith.constant 2.000000e+00 : f32
    %6 = vector.broadcast %cst_7 : f32 to vector<16x128xf32>
    %7 = arith.mulf %6, %5 : vector<16x128xf32>
    %8 = vector.broadcast %2 : vector<1x128xf32> to vector<16x128xf32>
    %9 = arith.subf %8, %7 : vector<16x128xf32>
    %cst_8 = arith.constant dense<0x7F800000> : vector<16xf32>
    %10 = vector.multi_reduction <minimumf>, %9, %cst_8 [1] : vector<16x128xf32> to vector<16xf32>
    %11 = vector.shape_cast %10 : vector<16xf32> to vector<16x1xf32>
    %12 = tpu.iota {dimensions = array<i32: 1>} : vector<16x128xi32>
    %13 = vector.broadcast %11 : vector<16x1xf32> to vector<16x128xf32>
    %14 = arith.cmpf oeq, %9, %13 : vector<16x128xf32>
    %c128_i32 = arith.constant 128 : i32
    %15 = vector.broadcast %c128_i32 : i32 to vector<16x128xi32>
    %16 = arith.select %14, %12, %15 : vector<16x128xi1>, vector<16x128xi32>
    %cst_9 = arith.constant dense<2147483647> : vector<16xi32>
    %17 = vector.multi_reduction <minsi>, %16, %cst_9 [1] : vector<16x128xi32> to vector<16xi32>
    %18 = vector.shape_cast %17 : vector<16xi32> to vector<16x1xi32>
    %19 = arith.mulf %0, %0 : vector<16x32xf32>
    %cst_10 = arith.constant dense<0.000000e+00> : vector<16xf32>
    %20 = vector.multi_reduction <add>, %19, %cst_10 [1] : vector<16x32xf32> to vector<16xf32>
    %21 = vector.shape_cast %20 : vector<16xf32> to vector<16x1xf32>
    %22 = arith.addf %21, %11 : vector<16x1xf32>
    %cst_11 = arith.constant 0.000000e+00 : f32
    %23 = vector.broadcast %cst_11 : f32 to vector<16x1xf32>
    %24 = arith.maximumf %22, %23 : vector<16x1xf32>
    %25 = arith.mulf %1, %1 : vector<16x32xf32>
    %cst_12 = arith.constant dense<0.000000e+00> : vector<16xf32>
    %26 = vector.multi_reduction <add>, %25, %cst_12 [1] : vector<16x32xf32> to vector<16xf32>
    %27 = vector.shape_cast %26 : vector<16xf32> to vector<16x1xf32>
    %28 = math.sqrt %24 : vector<16x1xf32>
    %29 = math.rsqrt %27 : vector<16x1xf32>
    %30 = arith.mulf %28, %29 : vector<16x1xf32>
    %cst_13 = arith.constant 9.99999996E-13 : f32
    %31 = vector.broadcast %cst_13 : f32 to vector<16x1xf32>
    %32 = arith.addf %30, %31 : vector<16x1xf32>
    %33 = vector.broadcast %32 : vector<16x1xf32> to vector<16x32xf32>
    %34 = arith.mulf %33, %1 : vector<16x32xf32>
    %35 = arith.addf %0, %34 : vector<16x32xf32>
    %c0_14 = arith.constant 0 : index
    %c0_15 = arith.constant 0 : index
    %36 = vector.load %arg5[%c0_14, %c0_15] : memref<16x32xf32, #tpu.memory_space<vmem>>, vector<16x32xf32>
    tpu.vector_store %arg5[%c0_14, %c0_15], %35 {strides = array<i32>} : memref<16x32xf32, #tpu.memory_space<vmem>>, vector<16x32xf32>,
    %c0_16 = arith.constant 0 : index
    %c0_17 = arith.constant 0 : index
    %37 = vector.load %arg6[%c0_16, %c0_17] : memref<16x1xi32, #tpu.memory_space<vmem>>, vector<16x1xi32>
    tpu.vector_store %arg6[%c0_16, %c0_17], %18 {strides = array<i32>} : memref<16x1xi32, #tpu.memory_space<vmem>>, vector<16x1xi32>,
    %c16_i32 = arith.constant 16 : i32
    %38 = arith.muli %arg0, %c16_i32 : i32
    %39 = tpu.iota {dimensions = array<i32: 0>} : vector<16x1xi32>
    %40 = vector.broadcast %38 : i32 to vector<16x1xi32>
    %41 = arith.addi %40, %39 : vector<16x1xi32>
    %c16_i32_18 = arith.constant 16 : i32
    %42 = vector.broadcast %c16_i32_18 : i32 to vector<16x1xi32>
    %43 = arith.cmpi slt, %41, %42 : vector<16x1xi32>
    %44 = vector.broadcast %18 : vector<16x1xi32> to vector<16x128xi32>
    %45 = arith.cmpi eq, %12, %44 : vector<16x128xi32>
    %46 = vector.broadcast %43 : vector<16x1xi1> to vector<16x128xi1>
    %47 = arith.andi %45, %46 : vector<16x128xi1>
    %cst_19 = arith.constant 1.000000e+00 : f32
    %cst_20 = arith.constant 0.000000e+00 : f32
    %48 = vector.broadcast %cst_19 : f32 to vector<16x128xf32>
    %49 = vector.broadcast %cst_20 : f32 to vector<16x128xf32>
    %50 = arith.select %47, %48, %49 : vector<16x128xi1>, vector<16x128xf32>
    %cst_21 = arith.constant dense<0.000000e+00> : vector<128xf32>
    %51 = vector.multi_reduction <add>, %50, %cst_21 [0] : vector<16x128xf32> to vector<128xf32>
    %52 = vector.shape_cast %51 : vector<128xf32> to vector<1x128xf32>
    %53 = vector.shape_cast %52 : vector<1x128xf32> to vector<1x1x128xf32>
    %c0_22 = arith.constant 0 : index
    %c0_23 = arith.constant 0 : index
    %c0_24 = arith.constant 0 : index
    %54 = vector.load %arg7[%c0_22, %c0_23, %c0_24] : memref<1x1x128xf32, #tpu.memory_space<vmem>>, vector<1x1x128xf32>
    tpu.vector_store %arg7[%c0_22, %c0_23, %c0_24], %53 {strides = array<i32>} : memref<1x1x128xf32, #tpu.memory_space<vmem>>, vector<1x1x128xf32>,
    %55 = arith.mulf %32, %32 : vector<16x1xf32>
    %56 = arith.mulf %55, %27 : vector<16x1xf32>
    %cst_25 = arith.constant 0.000000e+00 : f32
    %57 = vector.broadcast %cst_25 : f32 to vector<16x1xf32>
    %58 = arith.select %43, %56, %57 : vector<16x1xi1>, vector<16x1xf32>
    %c0_26 = arith.constant 0 : index
    %c0_27 = arith.constant 0 : index
    %59 = vector.load %arg8[%c0_26, %c0_27] : memref<16x1xf32, #tpu.memory_space<vmem>>, vector<16x1xf32>
    tpu.vector_store %arg8[%c0_26, %c0_27], %58 {strides = array<i32>} : memref<16x1xf32, #tpu.memory_space<vmem>>, vector<16x1xf32>,
    return
  }
  func.func @transform_0(%arg0: i32) -> (i32, i32) {
    %c0_i32 = arith.constant 0 : i32
    %c0_i32_0 = arith.constant 0 : i32
    return %arg0, %c0_i32 : i32, i32
  }
  func.func @transform_1(%arg0: i32) -> (i32, i32) {
    %c0_i32 = arith.constant 0 : i32
    %c0_i32_0 = arith.constant 0 : i32
    %c0_i32_1 = arith.constant 0 : i32
    return %c0_i32, %c0_i32_0 : i32, i32
  }
  func.func @transform_2(%arg0: i32) -> (i32, i32) {
    %c0_i32 = arith.constant 0 : i32
    %c0_i32_0 = arith.constant 0 : i32
    %c0_i32_1 = arith.constant 0 : i32
    return %c0_i32, %c0_i32_0 : i32, i32
  }
  func.func @transform_3(%arg0: i32) -> (i32, i32) {
    %c0_i32 = arith.constant 0 : i32
    %c0_i32_0 = arith.constant 0 : i32
    return %arg0, %c0_i32 : i32, i32
  }
  func.func @transform_4(%arg0: i32) -> (i32, i32) {
    %c0_i32 = arith.constant 0 : i32
    %c0_i32_0 = arith.constant 0 : i32
    return %arg0, %c0_i32 : i32, i32
  }
  func.func @transform_5(%arg0: i32) -> (i32, i32) {
    %c0_i32 = arith.constant 0 : i32
    %c0_i32_0 = arith.constant 0 : i32
    return %arg0, %c0_i32 : i32, i32
  }
  func.func @transform_6(%arg0: i32) -> (i32, i32, i32) {
    %c0_i32 = arith.constant 0 : i32
    %c0_i32_0 = arith.constant 0 : i32
    %c0_i32_1 = arith.constant 0 : i32
    return %arg0, %c0_i32, %c0_i32_0 : i32, i32, i32
  }
  func.func @transform_7(%arg0: i32) -> (i32, i32) {
    %c0_i32 = arith.constant 0 : i32
    %c0_i32_0 = arith.constant 0 : i32
    return %arg0, %c0_i32 : i32, i32
  }
}

</mosaic_0001>

<llo_original>
// kernel: nsvq_forward.1
$region0: #{nsvq_forward.1}
  #allocation0 [shape = 'u32[]', space=smem, size = 0x4, offset = 0x4, fixed_abs, tag = 'smem constant byte address 0x4 - core index']
  #allocation1 [shape = 'u32[72,128]{1,0:T(1,128)}', space=vmem, size = 0x9000, scoped, tag = 'internal scratch']
  %s0 = inlined_call_operand.vmem [shape: f32[16,32], index: 0, kind: input, shape index: {}]
  %s1 = inlined_call_operand.vmem [shape: bf16[128,32], index: 1, kind: input, shape index: {}]
  %s2 = inlined_call_operand.vmem [shape: f32[1,128], index: 2, kind: input, shape index: {}]
  %s3 = inlined_call_operand.vmem [shape: f32[16,32], index: 3, kind: input, shape index: {}]
  %s4 = inlined_call_operand.hbm [shape: f32[16,32], index: 4, kind: output, shape index: {0}]
  %s5 = inlined_call_operand.vmem [shape: s32[16,1], index: 5, kind: output, shape index: {1}]
  %s6 = inlined_call_operand.vmem [shape: f32[1,1,128], index: 6, kind: output, shape index: {2}]
  %s7 = inlined_call_operand.vmem [shape: f32[16,1], index: 7, kind: output, shape index: {3}]
  %8 = xla_tuple %s4, %s5, %s6, %s7
  %s9 = sld [smem:[#allocation0]]
  $region50: #{nsvq_forward.1} parent=0
    _
  %s11 = ssub.s32 1, %s9
  %s12 = scalar_select 0, %s11, %s9
  $region1: #{nsvq_forward.1} parent=0
    #allocation2 [shape = 'u8[8192]{0}', space=vmem, size = 0x2000, scoped, tag = 'output window, operand 0, single buffered']
    #allocation3 [shape = 's32[1]{0}', space=sflag, size = 0x4, scoped, tag = 'scoped memory for nsvq_forward.1']
    %13 = vsyncpa [#allocation3], 0
    // Predicated region
    $region2: #{nsvq_forward.1} parent=1 // pred_check
      _
    $region3: #{nsvq_forward.1} parent=1 // pred_check_branch
      %15 = sbr.rel (0) target = $region5
    $region4: #{nsvq_forward.1} parent=1 // pred_region
      _
    $region5: #{nsvq_forward.1} parent=1 // pred_fallthru
      _
    // Predicated region
    $region6: #{nsvq_forward.1} parent=1 // pred_check
      _
    $region7: #{nsvq_forward.1} parent=1 // pred_check_branch
      %17 = sbr.rel (0) target = $region9
    $region8: #{nsvq_forward.1} parent=1 // pred_region
      _
    $region9: #{nsvq_forward.1} parent=1 // pred_fallthru
      _
    // Predicated region
    $region10: #{nsvq_forward.1} parent=1 // pred_check
      _
    $region11: #{nsvq_forward.1} parent=1 // pred_check_branch
      %19 = sbr.rel (0) target = $region13
    $region12: #{nsvq_forward.1} parent=1 // pred_region
      _
    $region13: #{nsvq_forward.1} parent=1 // pred_fallthru
      _
    // Predicated region
    $region14: #{nsvq_forward.1} parent=1 // pred_check
      _
    $region15: #{nsvq_forward.1} parent=1 // pred_check_branch
      %21 = sbr.rel (0) target = $region17
    $region16: #{nsvq_forward.1} parent=1 // pred_region
      _
    $region17: #{nsvq_forward.1} parent=1 // pred_fallthru
      _
    %v22 = vld [vmem:[%s0] sm:$0xff]
    %v23 = vld [vmem:[%s0 + $0x8] sm:$0xff]
    %v24 = vld [vmem:[%s3] sm:$0xff]
    %v25 = vld [vmem:[%s3 + $0x8] sm:$0xff]
    %v26 = vld [vmem:[%s2] sm:$0x1]
    %v27 = vpack.c.bf16 %v23, %v22
    %v28 = vld [vmem:[%s1] sm:$0xf]
    %v29 = vld [vmem:[%s1 + $0x4] sm:$0xf]
    %v30 = vld [vmem:[%s1 + $0x8] sm:$0xf]
    %v31 = vld [vmem:[%s1 + $0xc] sm:$0xf]
    %v32 = vld [vmem:[%s1 + $0x10] sm:$0xf]
    %v33 = vld [vmem:[%s1 + $0x14] sm:$0xf]
    %v34 = vld [vmem:[%s1 + $0x18] sm:$0xf]
    %v35 = vld [vmem:[%s1 + $0x1c] sm:$0xf]
    %v36 = vld [vmem:[%s1 + $0x20] sm:$0xf]
    %v37 = vld [vmem:[%s1 + $0x24] sm:$0xf]
    %v38 = vld [vmem:[%s1 + $0x28] sm:$0xf]
    %v39 = vld [vmem:[%s1 + $0x2c] sm:$0xf]
    %v40 = vld [vmem:[%s1 + $0x30] sm:$0xf]
    %v41 = vld [vmem:[%s1 + $0x34] sm:$0xf]
    %v42 = vld [vmem:[%s1 + $0x38] sm:$0xf]
    %v43 = vld [vmem:[%s1 + $0x3c] sm:$0xf]
    %v60 = vunpack.c.l.b16 %v28
    %v61 = vunpack.c.l.b16 %v29
    %v62 = vunpack.c.l.b16 %v30
    %v63 = vunpack.c.l.b16 %v31
    %v64 = vunpack.c.l.b16 %v32
    %v65 = vunpack.c.l.b16 %v33
    %v66 = vunpack.c.l.b16 %v34
    %v67 = vunpack.c.l.b16 %v35
    %v68 = vunpack.c.l.b16 %v36
    %v69 = vunpack.c.l.b16 %v37
    %v70 = vunpack.c.l.b16 %v38
    %v71 = vunpack.c.l.b16 %v39
    %v72 = vunpack.c.l.b16 %v40
    %v73 = vunpack.c.l.b16 %v41
    %v74 = vunpack.c.l.b16 %v42
    %v75 = vunpack.c.l.b16 %v43
    %v76 = vpack.c.b16 %v61, %v60
    %v77 = vpack.c.b16 %v63, %v62
    %v78 = vpack.c.b16 %v65, %v64
    %v79 = vpack.c.b16 %v67, %v66
    %v80 = vpack.c.b16 %v69, %v68
    %v81 = vpack.c.b16 %v71, %v70
    %v82 = vpack.c.b16 %v73, %v72
    %v83 = vpack.c.b16 %v75, %v74
    %vm84 = vcmask 261120
    %v86 = vsel %vm84, %v27, 0
    %v89 = vsel %vm84, %v76, 0
    %v92 = vsel %vm84, %v77, 0
    %v95 = vsel %vm84, %v78, 0
    %v98 = vsel %vm84, %v79, 0
    %v101 = vsel %vm84, %v80, 0
    %v104 = vsel %vm84, %v81, 0
    %v107 = vsel %vm84, %v82, 0
    %v110 = vsel %vm84, %v83, 0
    %112 = vmatpush.bf16.xpose.msra.mxu0 %v110
    %113 = vmatpush.bf16.xpose.msra.mxu0 %v107
    %114 = vmatpush.bf16.xpose.msra.mxu0 %v104
    %115 = vmatpush.bf16.xpose.msra.mxu0 %v101
    %116 = vmatpush.bf16.xpose.msra.mxu0 %v98
    %117 = vmatpush.bf16.xpose.msra.mxu0 %v95
    %118 = vmatpush.bf16.xpose.msra.mxu0 %v92
    %119 = vmatpush.bf16.xpose.msra.mxu0 %v89
    %120 = vmatmul.bf16.gmra.mxu0 %v86
    %v121 = vpop.f32.mrf.mxu0
    %v122 = vadd.f32 0.0, %v121
    %v123 = vpop.f32.mrf.mxu0
    %v124 = vadd.f32 0.0, %v123
    %125 = vdwg.mxu0
    %v126 = vmul.f32 %v122, 2.0
    %v127 = vmul.f32 %v124, 2.0
    %v129 = vperm.slane %v26, 0
    %v131 = vsub.f32 %v129, %v126
    %v132 = vsub.f32 %v129, %v127
    %133 = vmin.xlane.f32.xlu0 %v131
    %v134 = vpop.xlane.xlu0 %133
    %135 = vmin.xlane.f32.xlu0 %v132
    %v136 = vpop.xlane.xlu0 %135
    %v137 = vlaneseq
    %v138 = vand.u32 %v137, 127
    %vm139 = vcmp.eq.f32.partialorder %v131, %v134
    %vm140 = vcmp.eq.f32.partialorder %v132, %v136
    %v141 = vsel %vm139, %v138, 128
    %v142 = vsel %vm140, %v138, 128
    %v143 = vand.u32 %v141, 65535
    %v144 = vshra.s32 %v141, 16
    %v145 = vcvt.s32.f32 %v143
    %v146 = vcvt.s32.f32 %v144
    %147 = vmin.xlane.f32.xlu0 %v146
    %v148 = vpop.xlane.xlu0 %147
    %vm149 = vcmp.eq.f32.partialorder %v146, %v148
    %v150 = vsel %vm149, %v145, inf
    %151 = vmin.xlane.f32.xlu0 %v150
    %v152 = vpop.xlane.xlu0 %151
    %v153 = vcvt.f32.s32 %v152
    %v154 = vcvt.f32.s32 %v148
    %v155 = vshll.u32 %v154, 16
    %v156 = vadd.s32 %v155, %v153
    %v157 = vand.u32 %v142, 65535
    %v158 = vshra.s32 %v142, 16
    %v159 = vcvt.s32.f32 %v157
    %v160 = vcvt.s32.f32 %v158
    %161 = vmin.xlane.f32.xlu0 %v160
    %v162 = vpop.xlane.xlu0 %161
    %vm163 = vcmp.eq.f32.partialorder %v160, %v162
    %v164 = vsel %vm163, %v159, inf
    %165 = vmin.xlane.f32.xlu0 %v164
    %v166 = vpop.xlane.xlu0 %165
    %v167 = vcvt.f32.s32 %v166
    %v168 = vcvt.f32.s32 %v162
    %v169 = vshll.u32 %v168, 16
    %v170 = vadd.s32 %v169, %v167
    %v171 = vmul.f32 %v22, %v22
    %v172 = vmul.f32 %v23, %v23
    %v173 = vsel %vm84, %v171, 0.0
    %174 = vadd.xlane.f32.xlu0 %v173
    %v175 = vpop.xlane.xlu0 %174
    %v176 = vsel %vm84, %v172, 0.0
    %177 = vadd.xlane.f32.xlu0 %v176
    %v178 = vpop.xlane.xlu0 %177
    %v179 = vadd.f32 %v175, %v134
    %v180 = vadd.f32 %v178, %v136
    %v181 = vmax.f32 %v179, 0.0
    %v182 = vmax.f32 %v180, 0.0
    %v183 = vmul.f32 %v24, %v24
    %v184 = vmul.f32 %v25, %v25
    %v185 = vsel %vm84, %v183, 0.0
    %186 = vadd.xlane.f32.xlu0 %v185
    %v187 = vpop.xlane.xlu0 %186
    %v188 = vsel %vm84, %v184, 0.0
    %189 = vadd.xlane.f32.xlu0 %v188
    %v190 = vpop.xlane.xlu0 %189
    %v191 = vrsqrt.pop %v181
    %v192 = vmul.f32 %v191, %v181
    %v193 = vmul.f32 %v192, %v191
    %v194 = vmul.f32 0.5, %v193
    %v195 = vsub.f32 1.5, %v194
    %v196 = vmul.f32 %v191, %v195
    %v197 = vmul.f32 %v181, %v196
    %vm198 = vcmp.eq.f32.partialorder %v181, inf
    %v199 = vsel %vm198, %v181, %v197
    %vm200 = vcmp.eq.f32.partialorder %v181, 0.0
    %v201 = vand.u32 %v181, 2147483648
    %v202 = vsel %vm200, %v201, %v199
    %v203 = vrsqrt.pop %v182
    %v204 = vmul.f32 %v203, %v182
    %v205 = vmul.f32 %v204, %v203
    %v206 = vmul.f32 0.5, %v205
    %v207 = vsub.f32 1.5, %v206
    %v208 = vmul.f32 %v203, %v207
    %v209 = vmul.f32 %v182, %v208
    %vm210 = vcmp.eq.f32.partialorder %v182, inf
    %v211 = vsel %vm210, %v182, %v209
    %vm212 = vcmp.eq.f32.partialorder %v182, 0.0
    %v213 = vand.u32 %v182, 2147483648
    %v214 = vsel %vm212, %v213, %v211
    %v215 = vrsqrt.pop %v187
    %v216 = vmul.f32 %v215, %v187
    %v217 = vmul.f32 %v216, %v215
    %v218 = vmul.f32 0.5, %v217
    %v219 = vsub.f32 1.5, %v218
    %v220 = vmul.f32 %v215, %v219
    %vm221 = vweird.f32 %v187
    %vm222 = vweird.f32 %v215
    %vm223 = vmor %vm221, %vm222
    %v224 = vsel %vm223, %v215, %v220
    %v225 = vrsqrt.pop %v190
    %v226 = vmul.f32 %v225, %v190
    %v227 = vmul.f32 %v226, %v225
    %v228 = vmul.f32 0.5, %v227
    %v229 = vsub.f32 1.5, %v228
    %v230 = vmul.f32 %v225, %v229
    %vm231 = vweird.f32 %v190
    %vm232 = vweird.f32 %v225
    %vm233 = vmor %vm231, %vm232
    %v234 = vsel %vm233, %v225, %v230
    %v235 = vmul.f32 %v202, %v224
    %v236 = vmul.f32 %v214, %v234
    %v237 = vadd.f32 %v235, 1e-12
    %v238 = vadd.f32 %v236, 1e-12
    %v239 = vmul.f32 %v237, %v24
    %v240 = vmul.f32 %v238, %v25
    %v241 = vadd.f32 %v22, %v239
    %v242 = vadd.f32 %v23, %v240
    %243 = vst.msk [vmem:[#allocation2] sm:$0xff] %vm84, %v241
    %244 = vst.msk [vmem:[#allocation2 + $0x8] sm:$0xff] %vm84, %v242
    %vm245 = vcmask 7168
    %246 = vst.msk [vmem:[%s5] sm:$0xff] %vm245, %v156
    %247 = vst.msk [vmem:[%s5 + $0x8] sm:$0xff] %vm245, %v170
    %s248 = smul.u32 0, 16
    %v249 = vlaneseq
    %v250 = vshrl.u32 %v249, 7
    %v251 = vadd.s32 %v250, 8
    %v252 = vstv %s248
    %v253 = vadd.s32 %v252, %v250
    %v254 = vadd.s32 %v252, %v251
    %vm255 = vcmp.lt.s32.totalorder %v253, 16
    %vm256 = vcmp.lt.s32.totalorder %v254, 16
    %vm257 = vcmp.eq.s32.totalorder %v138, %v156
    %vm258 = vcmp.eq.s32.totalorder %v138, %v170
    %v259 = vsel %vm255, 1, 0
    %v260 = vsel %vm256, 1, 0
    %vm261 = vcmp.eq.s32.totalorder %v259, 1
    %vm262 = vcmp.eq.s32.totalorder %v260, 1
    %vm263 = vmand %vm257, %vm261
    %vm264 = vmand %vm258, %vm262
    %v265 = vsel %vm263, 1.0, 0.0
    %v266 = vsel %vm264, 1.0, 0.0
    %v267 = vadd.f32 %v265, %v266
    %v268 = vrot.slane %v267, 4
    %v269 = vadd.f32 %v267, %v268
    %v270 = vrot.slane %v269, 2
    %v271 = vadd.f32 %v269, %v270
    %v272 = vrot.slane %v271, 1
    %v273 = vadd.f32 %v271, %v272
    %274 = vst [vmem:[%s6] sm:$0x1] %v273
    %v275 = vmul.f32 %v237, %v237
    %v276 = vmul.f32 %v238, %v238
    %v277 = vmul.f32 %v275, %v187
    %v278 = vmul.f32 %v276, %v190
    %v279 = vsel %vm255, %v277, 0.0
    %v280 = vsel %vm256, %v278, 0.0
    %281 = vst.msk [vmem:[%s7] sm:$0xff] %vm245, %v279
    %282 = vst.msk [vmem:[%s7 + $0x8] sm:$0xff] %vm245, %v280
    // Predicated region
    $region18: #{nsvq_forward.1} parent=1 // pred_check
      _
    $region19: #{nsvq_forward.1} parent=1 // pred_check_branch
      %284 = sbr.rel (0) target = $region21
    $region20: #{nsvq_forward.1} parent=1 // pred_region
      %286 = vsyncadd [#allocation3], 0
      %s287 = sshll.u32 [#allocation2], 4
      %s288 = int_to_ptr.vmem [resolvable:$true] %s287
      %s289 = sshll.u32 %s4, 4
      %s290 = int_to_ptr.hbm [resolvable:$true] %s289
      %295 = dma.vmem_to_hbm [thread:$0]  %s288, 256, %s290, [#allocation3], 128, 128, 8
    $region21: #{nsvq_forward.1} parent=1 // pred_fallthru
      _
    // Predicated region
    $region22: #{nsvq_forward.1} parent=1 // pred_check
      _
    $region23: #{nsvq_forward.1} parent=1 // pred_check_branch
      %297 = sbr.rel (0) target = $region25
    $region24: #{nsvq_forward.1} parent=1 // pred_region
      _
    $region25: #{nsvq_forward.1} parent=1 // pred_fallthru
      _
    // Predicated region
    $region26: #{nsvq_forward.1} parent=1 // pred_check
      _
    $region27: #{nsvq_forward.1} parent=1 // pred_check_branch
      %299 = sbr.rel (0) target = $region29
    $region28: #{nsvq_forward.1} parent=1 // pred_region
      _
    $region29: #{nsvq_forward.1} parent=1 // pred_fallthru
      _
    // Predicated region
    $region30: #{nsvq_forward.1} parent=1 // pred_check
      _
    $region31: #{nsvq_forward.1} parent=1 // pred_check_branch
      %301 = sbr.rel (0) target = $region33
    $region32: #{nsvq_forward.1} parent=1 // pred_region
      _
    $region33: #{nsvq_forward.1} parent=1 // pred_fallthru
      _
    // Predicated region
    $region34: #{nsvq_forward.1} parent=1 // pred_check
      _
    $region35: #{nsvq_forward.1} parent=1 // pred_check_branch
      %303 = sbr.rel (0) target = $region37
    $region36: #{nsvq_forward.1} parent=1 // pred_region
      %305 = dma.done [#allocation3], 256
    $region37: #{nsvq_forward.1} parent=1 // pred_fallthru
      _
    // Predicated region
    $region38: #{nsvq_forward.1} parent=1 // pred_check
      _
    $region39: #{nsvq_forward.1} parent=1 // pred_check_branch
      %307 = sbr.rel (0) target = $region41
    $region40: #{nsvq_forward.1} parent=1 // pred_region
      _
    $region41: #{nsvq_forward.1} parent=1 // pred_fallthru
      _
    // Predicated region
    $region42: #{nsvq_forward.1} parent=1 // pred_check
      _
    $region43: #{nsvq_forward.1} parent=1 // pred_check_branch
      %309 = sbr.rel (0) target = $region45
    $region44: #{nsvq_forward.1} parent=1 // pred_region
      _
    $region45: #{nsvq_forward.1} parent=1 // pred_fallthru
      _
    // Predicated region
    $region46: #{nsvq_forward.1} parent=1 // pred_check
      _
    $region47: #{nsvq_forward.1} parent=1 // pred_check_branch
      %311 = sbr.rel (0) target = $region49
    $region48: #{nsvq_forward.1} parent=1 // pred_region
      _
    $region49: #{nsvq_forward.1} parent=1 // pred_fallthru
      _
    %312 = vsyncpa [#allocation3], 1

</llo_original>
